<compile_context>
chip_gen: v7x
topology: tpu7x:2x2x1
jax: 0.10.0
libtpu: 0.0.40
codegen_flags: <defaults>
</compile_context>

<pallas_src>
import functools
import math

import jax
import jax.numpy as jnp
from jax import lax
from jax.experimental import pallas as pl
from jax.experimental.pallas import tpu as pltpu


def _dice_sums_kernel(p_ref, t_ref, out_ref, *,
                      num_rows, block_rows, lane, n_inner,
                      chunk_rows, n_full_chunks, rem_rows, n_sub,
                      need_mask, native_elementwise):
    """Accumulate per-batch lane partials of sum(p*t) and sum(p)+sum(t).

    p_ref, t_ref: (1, block_rows, lane) blocks of the [B, R, lane] views.
    out_ref:      (1, 1, 2, n_sub, lane) float32 block, resident across the
                  row-tile (reduction) axis; row 0 = intersection, row 1 = denom.
    """
    j = pl.program_id(2)

    @pl.when(j == 0)
    def _init():
        out_ref[...] = jnp.zeros_like(out_ref)

    # Global row-tile index (the reduction axis may be split across cores).
    g = pl.program_id(0) * n_inner + j

    def chunk_sums(r0, rows, masked):
        p = p_ref[0, pl.ds(r0, rows), :]
        t = t_ref[0, pl.ds(r0, rows), :]
        if native_elementwise:
            # bf16/f16 inputs: do the elementwise work on packed vregs, cast the
            # per-element results to f32 before any accumulation.
            prod = (p * t).astype(jnp.float32)
            ssum = (p + t).astype(jnp.float32)
        else:
            p32 = p.astype(jnp.float32)
            t32 = t.astype(jnp.float32)
            prod = p32 * t32
            ssum = p32 + t32
        if masked:
            rid = (g * block_rows + r0
                   + lax.broadcasted_iota(jnp.int32, (rows, lane), 0))
            valid = rid < num_rows
            prod = jnp.where(valid, prod, 0.0)
            ssum = jnp.where(valid, ssum, 0.0)
        if n_sub == 8:
            # Keep 8-wide per-sublane partials: pure vreg adds, no 8->1 XLU step.
            prod = prod.reshape(rows // 8, 8, lane).sum(axis=0)
            ssum = ssum.reshape(rows // 8, 8, lane).sum(axis=0)
        else:
            prod = prod.sum(axis=0, keepdims=True)
            ssum = ssum.sum(axis=0, keepdims=True)
        return prod, ssum

    def accumulate(masked):
        acc_i = jnp.zeros((n_sub, lane), jnp.float32)
        acc_d = jnp.zeros((n_sub, lane), jnp.float32)
        if n_full_chunks > 0:
            def body(c, carry):
                ai, ad = carry
                r0 = pl.multiple_of(c * chunk_rows, 8)
                pi, ps = chunk_sums(r0, chunk_rows, masked)
                return ai + pi, ad + ps
            acc_i, acc_d = lax.fori_loop(0, n_full_chunks, body, (acc_i, acc_d))
        if rem_rows > 0:
            pi, ps = chunk_sums(n_full_chunks * chunk_rows, rem_rows, masked)
            acc_i = acc_i + pi
            acc_d = acc_d + ps
        out_ref[0, 0, 0, :, :] += acc_i
        out_ref[0, 0, 1, :, :] += acc_d

    if need_mask:
        is_edge = (g + 1) * block_rows > num_rows

        @pl.when(jnp.logical_not(is_edge))
        def _full():
            accumulate(False)

        @pl.when(is_edge)
        def _edge():
            accumulate(True)
    else:
        accumulate(False)


def soft_dice_loss(probs: jax.Array, targets: jax.Array,
                   smooth: float = 1e-6,
                   target_block_bytes: int = 8 << 20) -> jax.Array:
    """Pallas implementation of 1 - mean_batch(Dice) for binary segmentation.

    probs:   [B, 1, D, H, W] float, values in [0, 1]
    targets: [B, 1, D, H, W] binary {0, 1} (float / int / bool)
    returns: scalar float32
    """
    B = probs.shape[0]
    N = math.prod(probs.shape[1:])
    assert targets.shape[0] == B and math.prod(targets.shape[1:]) == N

    # bool is not a robust streaming dtype on TPU: cast to int8 (1-byte stream).
    if targets.dtype == jnp.bool_:
        targets = targets.astype(jnp.int8)

    p2 = probs.reshape(B, N)
    t2 = targets.reshape(B, N)

    # Lane-dense view [B, R, lane]: largest lane in {512,256,128} dividing N,
    # preferring one that leaves at least 8 rows.
    lane = None
    for cand in (512, 256, 128):
        if N % cand == 0 and N >= 8 * cand:
            lane = cand
            break
    if lane is None:
        for cand in (512, 256, 128):
            if N % cand == 0:
                lane = cand
                break
    if lane is None:
        # TODO(synk): ragged-N (<128-aligned) fallback pads with zeros, costing
        # one extra HBM pass; real volumes (D*H*W multiple of 128) never hit it.
        lane = 128
        n_pad = (-N) % lane
        p2 = jnp.pad(p2, ((0, 0), (0, n_pad)))
        t2 = jnp.pad(t2, ((0, 0), (0, n_pad)))

    n_padded = p2.shape[1]
    R = n_padded // lane
    p3 = p2.reshape(B, R, lane)
    t3 = t2.reshape(B, R, lane)

    # Dtype-aware row tile: ~target_block_bytes of *streamed* data per input per
    # buffer (multiple of 8), capped so double-buffered inputs stay well inside
    # the VMEM limit below (safe on v7x's 64 MiB VMEM).
    elem_bytes = max(p3.dtype.itemsize, t3.dtype.itemsize)
    tr = max(8, (target_block_bytes // (lane * elem_bytes)) // 8 * 8)
    tr = min(tr, max(8, ((9 << 20) // (lane * elem_bytes)) // 8 * 8))
    if tr >= R:
        tr = R
    n_tiles = (R + tr - 1) // tr

    # In-kernel compute chunk (~1 MiB of f32 per value): keeps elementwise
    # temporaries bounded regardless of how big the DMA block is.
    chunk_rows = max(8, ((1 << 20) // (lane * 4)) // 8 * 8)
    n_full_chunks = tr // chunk_rows
    rem_rows = tr - n_full_chunks * chunk_rows
    n_sub = 8 if tr % 8 == 0 else 1

    # 2-way core split of the reduction axis when the batch axis alone can't
    # balance the two v7x TensorCores (B == 1 or odd B).
    n_splits = 2 if (B % 2 == 1 and n_tiles >= 2) else 1
    n_inner = (n_tiles + n_splits - 1) // n_splits

    need_mask = (R % tr != 0) or (n_inner * n_splits != n_tiles)
    native_elementwise = (p3.dtype == t3.dtype) and p3.dtype in (jnp.bfloat16,
                                                                 jnp.float16)

    if n_inner * n_splits == n_tiles:
        def row_block(s, j):
            return s * n_inner + j
    else:
        # Clamp the duplicate tile of the last split; the kernel fully masks it.
        def row_block(s, j):
            return jnp.minimum(s * n_inner + j, n_tiles - 1)

    kernel = functools.partial(
        _dice_sums_kernel,
        num_rows=R, block_rows=tr, lane=lane, n_inner=n_inner,
        chunk_rows=chunk_rows, n_full_chunks=n_full_chunks, rem_rows=rem_rows,
        n_sub=n_sub, need_mask=need_mask, native_elementwise=native_elementwise)

    blk_bytes = tr * lane * elem_bytes
    vmem_limit = max(32 << 20, min(56 << 20, 4 * blk_bytes + (16 << 20)))

    partial = pl.pallas_call(
        kernel,
        out_shape=jax.ShapeDtypeStruct((n_splits, B, 2, n_sub, lane),
                                       jnp.float32),
        grid_spec=pltpu.PrefetchScalarGridSpec(
            num_scalar_prefetch=0,
            grid=(n_splits, B, n_inner),
            in_specs=[
                pl.BlockSpec((1, tr, lane), lambda s, b, j: (b, row_block(s, j), 0)),
                pl.BlockSpec((1, tr, lane), lambda s, b, j: (b, row_block(s, j), 0)),
            ],
            out_specs=pl.BlockSpec((1, 1, 2, n_sub, lane),
                                   lambda s, b, j: (s, b, 0, 0, 0)),
        ),
        compiler_params=pltpu.CompilerParams(
            dimension_semantics=("parallel", "parallel", "arbitrary"),
            vmem_limit_bytes=vmem_limit,
        ),
    )(p3, t3)

    # Tiny epilogue in plain JAX: sum over splits / sublanes / lanes, then dice.
    sums = jnp.sum(partial, axis=(0, 3, 4))          # (B, 2)
    inter = sums[:, 0]
    denom = sums[:, 1]
    dice = (2.0 * inter + smooth) / (denom + smooth)
    return jnp.mean(1.0 - dice)


def _reference_soft_dice_loss(probs, targets, smooth=1e-6):
    B = probs.shape[0]
    p = probs.reshape(B, -1).astype(jnp.float32)
    t = targets.reshape(B, -1).astype(jnp.float32)
    inter = jnp.sum(p * t, axis=1)
    sums = jnp.sum(p, axis=1) + jnp.sum(t, axis=1)
    dice = (2.0 * inter + smooth) / (sums + smooth)
    return jnp.mean(1.0 - dice)


if __name__ == "__main__":
    key = jax.random.PRNGKey(0)
    k1, k2, k3, k4, k5, k6 = jax.random.split(key, 6)

    # Case 1: canonical small [B, 1, D, H, W] input, default tiling.
    B, C, D, H, W = 2, 1, 8, 16, 16
    probs = jax.random.uniform(k1, (B, C, D, H, W), dtype=jnp.float32)
    targets = (jax.random.uniform(k2, (B, C, D, H, W)) > 0.5).astype(jnp.float32)
    loss = jax.block_until_ready(soft_dice_loss(probs, targets))
    ref = _reference_soft_dice_loss(probs, targets)
    assert jnp.allclose(loss, ref, atol=1e-5, rtol=1e-5), (loss, ref)

    # Case 2: B=1 with a ragged row count and a small forced tile -> exercises
    # the multi-tile reduction, the pl.when-gated edge mask, the 2-way core
    # split of the reduction axis (with a clamped duplicate tile) and the
    # chunked inner loop.
    probs2 = jax.random.uniform(k3, (1, 1, 40, 128, 128), dtype=jnp.float32)
    targets2 = (jax.random.uniform(k4, (1, 1, 40, 128, 128)) > 0.5).astype(jnp.float32)
    loss2 = jax.block_until_ready(
        soft_dice_loss(probs2, targets2, target_block_bytes=1 << 20))
    ref2 = _reference_soft_dice_loss(probs2, targets2)
    assert jnp.allclose(loss2, ref2, atol=1e-5, rtol=1e-5), (loss2, ref2)

    # Case 3: tiny input whose row count is not a multiple of 8 -> exercises the
    # full-extent block / 1-sublane accumulator path.
    probs3 = jax.random.uniform(k5, (1, 1, 1, 10, 128), dtype=jnp.float32)
    targets3 = (jax.random.uniform(k6, (1, 1, 1, 10, 128)) > 0.5).astype(jnp.float32)
    loss3 = jax.block_until_ready(soft_dice_loss(probs3, targets3))
    ref3 = _reference_soft_dice_loss(probs3, targets3)
    assert jnp.allclose(loss3, ref3, atol=1e-5, rtol=1e-5), (loss3, ref3)

    print("KERNEL_OK")
</pallas_src>

<mosaic_0001>
module attributes {stable_mosaic.version = 11 : i64} {
  func.func @_dice_sums_kernel(%arg0: i32, %arg1: i32, %arg2: i32, %arg3: memref<1x8x256xf32, #tpu.memory_space<vmem>>, %arg4: memref<1x8x256xf32, #tpu.memory_space<vmem>>, %arg5: memref<1x1x2x8x256xf32, #tpu.memory_space<vmem>>) attributes {dimension_semantics = [#tpu.dimension_semantics<parallel>, #tpu.dimension_semantics<parallel>, #tpu.dimension_semantics<arbitrary>], iteration_bounds = array<i64: 1, 2, 1>, scalar_prefetch = 0 : i64, scratch_operands = 0 : i64, tpu.core_type = #tpu.core_type<tc>, window_params = [{transform_indices = @transform_0, window_bounds = array<i64: 1, 8, 256>}, {transform_indices = @transform_1, window_bounds = array<i64: 1, 8, 256>}, {transform_indices = @transform_2, window_bounds = array<i64: 1, 1, 2, 8, 256>}]} {
    %c0_i32 = arith.constant 0 : i32
    %0 = arith.cmpi eq, %arg2, %c0_i32 : i32
    %1 = arith.extui %0 : i1 to i32
    %c0_i32_0 = arith.constant 0 : i32
    %2 = arith.cmpi ne, %1, %c0_i32_0 : i32
    scf.if %2 {
      %cst_28 = arith.constant 0.000000e+00 : f32
      %29 = vector.broadcast %cst_28 : f32 to vector<1x1x2x8x256xf32>
      %c0_29 = arith.constant 0 : index
      %c0_30 = arith.constant 0 : index
      %c0_31 = arith.constant 0 : index
      %c0_32 = arith.constant 0 : index
      %c0_33 = arith.constant 0 : index
      %30 = vector.load %arg5[%c0_29, %c0_30, %c0_31, %c0_32, %c0_33] : memref<1x1x2x8x256xf32, #tpu.memory_space<vmem>>, vector<1x1x2x8x256xf32>
      tpu.vector_store %arg5[%c0_29, %c0_30, %c0_31, %c0_32, %c0_33], %29 {strides = array<i32>} : memref<1x1x2x8x256xf32, #tpu.memory_space<vmem>>, vector<1x1x2x8x256xf32>,
    } else {
    }
    %cst = arith.constant 0.000000e+00 : f32
    %3 = vector.broadcast %cst : f32 to vector<8x256xf32>
    %cst_1 = arith.constant 0.000000e+00 : f32
    %4 = vector.broadcast %cst_1 : f32 to vector<8x256xf32>
    %c0 = arith.constant 0 : index
    %c0_2 = arith.constant 0 : index
    %c0_3 = arith.constant 0 : index
    %5 = vector.load %arg3[%c0, %c0_2, %c0_3] : memref<1x8x256xf32, #tpu.memory_space<vmem>>, vector<1x8x256xf32>
    %6 = vector.shape_cast %5 : vector<1x8x256xf32> to vector<8x256xf32>
    %c0_4 = arith.constant 0 : index
    %c0_5 = arith.constant 0 : index
    %c0_6 = arith.constant 0 : index
    %7 = vector.load %arg4[%c0_4, %c0_5, %c0_6] : memref<1x8x256xf32, #tpu.memory_space<vmem>>, vector<1x8x256xf32>
    %8 = vector.shape_cast %7 : vector<1x8x256xf32> to vector<8x256xf32>
    %9 = arith.mulf %6, %8 : vector<8x256xf32>
    %10 = arith.addf %6, %8 : vector<8x256xf32>
    %11 = vector.shape_cast %9 : vector<8x256xf32> to vector<1x8x256xf32>
    %cst_7 = arith.constant dense<0.000000e+00> : vector<8x256xf32>
    %12 = vector.multi_reduction <add>, %11, %cst_7 [0] : vector<1x8x256xf32> to vector<8x256xf32>
    %13 = vector.shape_cast %10 : vector<8x256xf32> to vector<1x8x256xf32>
    %cst_8 = arith.constant dense<0.000000e+00> : vector<8x256xf32>
    %14 = vector.multi_reduction <add>, %13, %cst_8 [0] : vector<1x8x256xf32> to vector<8x256xf32>
    %15 = arith.addf %3, %12 : vector<8x256xf32>
    %16 = arith.addf %4, %14 : vector<8x256xf32>
    %c0_9 = arith.constant 0 : index
    %c0_10 = arith.constant 0 : index
    %c0_11 = arith.constant 0 : index
    %c0_12 = arith.constant 0 : index
    %c0_13 = arith.constant 0 : index
    %17 = vector.load %arg5[%c0_9, %c0_10, %c0_11, %c0_12, %c0_13] : memref<1x1x2x8x256xf32, #tpu.memory_space<vmem>>, vector<1x1x1x8x256xf32>
    %18 = vector.shape_cast %17 : vector<1x1x1x8x256xf32> to vector<8x256xf32>
    %19 = arith.addf %18, %15 : vector<8x256xf32>
    %c0_14 = arith.constant 0 : index
    %c0_15 = arith.constant 0 : index
    %c0_16 = arith.constant 0 : index
    %c0_17 = arith.constant 0 : index
    %c0_18 = arith.constant 0 : index
    %20 = vector.load %arg5[%c0_14, %c0_15, %c0_16, %c0_17, %c0_18] : memref<1x1x2x8x256xf32, #tpu.memory_space<vmem>>, vector<1x1x1x8x256xf32>
    %21 = vector.shape_cast %20 : vector<1x1x1x8x256xf32> to vector<8x256xf32>
    %22 = vector.shape_cast %19 : vector<8x256xf32> to vector<1x1x1x8x256xf32>
    tpu.vector_store %arg5[%c0_14, %c0_15, %c0_16, %c0_17, %c0_18], %22 {strides = array<i32>} : memref<1x1x2x8x256xf32, #tpu.memory_space<vmem>>, vector<1x1x1x8x256xf32>,
    %c0_19 = arith.constant 0 : index
    %c0_20 = arith.constant 0 : index
    %c1 = arith.constant 1 : index
    %c0_21 = arith.constant 0 : index
    %c0_22 = arith.constant 0 : index
    %23 = vector.load %arg5[%c0_19, %c0_20, %c1, %c0_21, %c0_22] : memref<1x1x2x8x256xf32, #tpu.memory_space<vmem>>, vector<1x1x1x8x256xf32>
    %24 = vector.shape_cast %23 : vector<1x1x1x8x256xf32> to vector<8x256xf32>
    %25 = arith.addf %24, %16 : vector<8x256xf32>
    %c0_23 = arith.constant 0 : index
    %c0_24 = arith.constant 0 : index
    %c1_25 = arith.constant 1 : index
    %c0_26 = arith.constant 0 : index
    %c0_27 = arith.constant 0 : index
    %26 = vector.load %arg5[%c0_23, %c0_24, %c1_25, %c0_26, %c0_27] : memref<1x1x2x8x256xf32, #tpu.memory_space<vmem>>, vector<1x1x1x8x256xf32>
    %27 = vector.shape_cast %26 : vector<1x1x1x8x256xf32> to vector<8x256xf32>
    %28 = vector.shape_cast %25 : vector<8x256xf32> to vector<1x1x1x8x256xf32>
    tpu.vector_store %arg5[%c0_23, %c0_24, %c1_25, %c0_26, %c0_27], %28 {strides = array<i32>} : memref<1x1x2x8x256xf32, #tpu.memory_space<vmem>>, vector<1x1x1x8x256xf32>,
    return
  }
  func.func @transform_0(%arg0: i32, %arg1: i32, %arg2: i32) -> (i32, i32, i32) {
    %c1_i32 = arith.constant 1 : i32
    %0 = arith.muli %arg0, %c1_i32 : i32
    %1 = arith.addi %0, %arg2 : i32
    %c0_i32 = arith.constant 0 : i32
    %c0_i32_0 = arith.constant 0 : i32
    return %arg1, %1, %c0_i32 : i32, i32, i32
  }
  func.func @transform_1(%arg0: i32, %arg1: i32, %arg2: i32) -> (i32, i32, i32) {
    %c1_i32 = arith.constant 1 : i32
    %0 = arith.muli %arg0, %c1_i32 : i32
    %1 = arith.addi %0, %arg2 : i32
    %c0_i32 = arith.constant 0 : i32
    %c0_i32_0 = arith.constant 0 : i32
    return %arg1, %1, %c0_i32 : i32, i32, i32
  }
  func.func @transform_2(%arg0: i32, %arg1: i32, %arg2: i32) -> (i32, i32, i32, i32, i32) {
    %c0_i32 = arith.constant 0 : i32
    %c0_i32_0 = arith.constant 0 : i32
    %c0_i32_1 = arith.constant 0 : i32
    %c0_i32_2 = arith.constant 0 : i32
    return %arg0, %arg1, %c0_i32, %c0_i32_0, %c0_i32_1 : i32, i32, i32, i32, i32
  }
}

</mosaic_0001>

<llo_original>
// kernel: tpu_custom_call.1
$region0: #{tpu_custom_call.1}
  #allocation0 [shape = 'u32[]', space=smem, size = 0x4, offset = 0x4, fixed_abs, tag = 'smem constant byte address 0x4 - core index']
  #allocation1 [shape = 'u32[144,128]{1,0:T(1,128)}', space=vmem, size = 0x12000, scoped, tag = 'internal scratch']
  %s0 = inlined_call_operand.hbm [shape: f32[2,8,256], index: 0, kind: input, shape index: {}]
  %s1 = inlined_call_operand.hbm [shape: f32[2,8,256], index: 1, kind: input, shape index: {}]
  %s2 = inlined_call_operand.hbm [shape: f32[1,2,2,8,256], index: 2, kind: output, shape index: {}]
  %s3 = sld [smem:[#allocation0]]
  $region53: #{tpu_custom_call.1} parent=0
    _
  %s5 = ssub.s32 1, %s3
  %s6 = scalar_select 0, %s5, %s3
  $region1: #{tpu_custom_call.1} parent=0
    #allocation2 [shape = 'u8[16384]{0}', space=vmem, size = 0x4000, scoped, tag = 'input window, operand 0']
    #allocation3 [shape = 's32[2]{0}', space=sflag, size = 0x8, scoped, tag = 'scoped memory for tpu_custom_call.1']
    #allocation4 [shape = 's32[2]{0}', space=sflag, size = 0x8, scoped, tag = 'scoped memory for tpu_custom_call.1']
    #allocation5 [shape = 'u8[16384]{0}', space=vmem, size = 0x4000, scoped, tag = 'input window, operand 1']
    #allocation6 [shape = 's32[2]{0}', space=sflag, size = 0x8, scoped, tag = 'scoped memory for tpu_custom_call.1']
    #allocation7 [shape = 'u8[32768]{0}', space=vmem, size = 0x8000, scoped, tag = 'output window, operand 0']
    %7 = vsyncpa [#allocation3], 0
    %s8 = scalar_lea.sflag [#allocation3], 1
    %9 = vsyncpa %s8, 0
    %10 = vsyncpa [#allocation6], 0
    %s11 = scalar_lea.sflag [#allocation6], 1
    %12 = vsyncpa %s11, 0
    %13 = vsyncpa [#allocation4], 0
    %s14 = scalar_lea.sflag [#allocation4], 1
    %15 = vsyncpa %s14, 0
    loop: start=0, step=1, limit=4
    $region2: #{tpu_custom_call.1} parent=1 // loop_pre_header
      _
    $region3: #{tpu_custom_call.1} parent=1 // loop_header
      %s17 = sphi 0, %s21
      %p18 = scmp.ge.s32.totalorder %s17, 4
      %s24 = sphi 0, %s43
      %s25 = sphi 0, %s39
      %s26 = sphi 0, %s35
      %s27 = sphi 0, %s24
      %s28 = sphi 0, %s25
      %s29 = sphi 0, %s26
      %s30 = sphi 0, %s27
      %s31 = sphi 0, %s28
      %s32 = sphi 0, %s29
      %s50 = sphi 0, %s52
      %s53 = sphi 0, %s50
      %s54 = sphi 0, %s53
      %s70 = sphi 0, %s54
      %s80 = sphi 0, %s82
      %s83 = sphi 0, %s80
      %s84 = sphi 0, %s83
      %s100 = sphi 0, %s84
      %s108 = sphi 0, %s110
      %s111 = sphi 0, %s108
      %s112 = sphi 0, %s111
      %s128 = sphi 0, %s112
    $region4: #{tpu_custom_call.1} parent=1 // loop_header_branch
      %20 = sbr.rel (%p18) target = $region8
    $region5: #{tpu_custom_call.1} parent=1 // loop_body
      %s22 = ssub.s32 %s17, 1
      %s23 = ssub.s32 %s17, 2
      %s33 = sadd.s32 1, %s26
      %p34 = scmp.ge.s32.totalorder %s33, 1
      %s35 = scalar_select %p34, 0, %s33
      %s36 = sadd.s32 1, %s25
      %s37 = scalar_select %p34, %s36, %s25
      %p38 = scmp.ge.s32.totalorder %s37, 2
      %s39 = scalar_select %p38, 0, %s37
      %s40 = sadd.s32 1, %s24
      %s41 = scalar_select %p38, %s40, %s24
      %p42 = scmp.ge.s32.totalorder %s41, 1
      %s43 = scalar_select %p42, 0, %s41
      %s44 = sadd.s32 %s24, %s26
      %s45 = sadd.s32 %s43, %s35
      %s46 = ssub.s32 %s25, %s39
      %s47 = ssub.s32 %s44, %s45
      %s48 = sor.u32 %s46, %s47
      %p49 = scmp.eq.s32.totalorder %s48, 0
      %s51 = sadd.s32 %s50, 1
      %s52 = scalar_select %p49, %s50, %s51
      %p55 = pneg %p49
      %p56 = scmp.eq.s32.totalorder %s17, 1
      %p57 = por %p55, %p56
      %p58 = scmp.ne.s32.totalorder %s50, %s53
      %p59 = scmp.eq.s32.totalorder %s17, 0
      %p60 = por %p58, %p59
      %p61 = scmp.ne.s32.totalorder %s50, %s53
      %p62 = scmp.eq.s32.totalorder %s22, 1
      %p63 = por %p61, %p62
      %p64 = scmp.ne.s32.totalorder %s53, %s54
      %p65 = scmp.eq.s32.totalorder %s22, 0
      %p66 = por %p64, %p65
      %p67 = scmp.ne.s32.totalorder %s53, %s54
      %p68 = scmp.eq.s32.totalorder %s23, 1
      %p69 = por %p67, %p68
      %p71 = scmp.ne.s32.totalorder %s54, %s70
      %p72 = scmp.eq.s32.totalorder %s23, 0
      %p73 = por %p71, %p72
      %s74 = sadd.s32 %s24, %s26
      %s75 = sadd.s32 %s43, %s35
      %s76 = ssub.s32 %s25, %s39
      %s77 = ssub.s32 %s74, %s75
      %s78 = sor.u32 %s76, %s77
      %p79 = scmp.eq.s32.totalorder %s78, 0
      %s81 = sadd.s32 %s80, 1
      %s82 = scalar_select %p79, %s80, %s81
      %p85 = pneg %p79
      %p86 = scmp.eq.s32.totalorder %s17, 1
      %p87 = por %p85, %p86
      %p88 = scmp.ne.s32.totalorder %s80, %s83
      %p89 = scmp.eq.s32.totalorder %s17, 0
      %p90 = por %p88, %p89
      %p91 = scmp.ne.s32.totalorder %s80, %s83
      %p92 = scmp.eq.s32.totalorder %s22, 1
      %p93 = por %p91, %p92
      %p94 = scmp.ne.s32.totalorder %s83, %s84
      %p95 = scmp.eq.s32.totalorder %s22, 0
      %p96 = por %p94, %p95
      %p97 = scmp.ne.s32.totalorder %s83, %s84
      %p98 = scmp.eq.s32.totalorder %s23, 1
      %p99 = por %p97, %p98
      %p101 = scmp.ne.s32.totalorder %s84, %s100
      %p102 = scmp.eq.s32.totalorder %s23, 0
      %p103 = por %p101, %p102
      %s104 = ssub.s32 %s24, %s43
      %s105 = ssub.s32 %s25, %s39
      %s106 = sor.u32 %s104, %s105
      %p107 = scmp.eq.s32.totalorder %s106, 0
      %s109 = sadd.s32 %s108, 1
      %s110 = scalar_select %p107, %s108, %s109
      %p113 = pneg %p107
      %p114 = scmp.eq.s32.totalorder %s17, 1
      %p115 = por %p113, %p114
      %p116 = scmp.ne.s32.totalorder %s108, %s111
      %p117 = scmp.eq.s32.totalorder %s17, 0
      %p118 = por %p116, %p117
      %p119 = scmp.ne.s32.totalorder %s108, %s111
      %p120 = scmp.eq.s32.totalorder %s22, 1
      %p121 = por %p119, %p120
      %p122 = scmp.ne.s32.totalorder %s111, %s112
      %p123 = scmp.eq.s32.totalorder %s22, 0
      %p124 = por %p122, %p123
      %p125 = scmp.ne.s32.totalorder %s111, %s112
      %p126 = scmp.eq.s32.totalorder %s23, 1
      %p127 = por %p125, %p126
      %p129 = scmp.ne.s32.totalorder %s112, %s128
      %p130 = scmp.eq.s32.totalorder %s23, 0
      %p131 = por %p129, %p130
      %p132 = scmp.le.s32.totalorder 1, %s17
      %p133 = scmp.lt.s32.totalorder %s17, 3
      %p134 = pnand %p132, %p133
      %p135 = pneg %p134
      // Predicated region
      $region9: #{tpu_custom_call.1} parent=5 // pred_check
        _
      $region10: #{tpu_custom_call.1} parent=5 // pred_check_branch
        %137 = sbr.rel (%p134) target = $region12
      $region11: #{tpu_custom_call.1} parent=5 // pred_region
        %s138 = ssub.s32 %s17, 1
      $region12: #{tpu_custom_call.1} parent=5 // pred_fallthru
        _
      %p139 = scmp.lt.s32.totalorder %s17, 2
      // Predicated region
      $region13: #{tpu_custom_call.1} parent=5 // pred_check
        %p140 = pneg %p139
      $region14: #{tpu_custom_call.1} parent=5 // pred_check_branch
        %142 = sbr.rel (%p140) target = $region16
      $region15: #{tpu_custom_call.1} parent=5 // pred_region
        // Predicated region
        $region17: #{tpu_custom_call.1} parent=15 // pred_check
          %p143 = pneg %p60
        $region18: #{tpu_custom_call.1} parent=15 // pred_check_branch
          %145 = sbr.rel (%p143) target = $region20
        $region19: #{tpu_custom_call.1} parent=15 // pred_region
          %s146 = sand.u32 %s50, 1
          %s147 = scalar_lea.sflag [#allocation3], %s146
          %s148 = sand.u32 %s50, 1
          %s149 = smul.addr %s148, 16
          %s150 = scalar_lea.vmem [#allocation2], %s149
          %s151 = sadd.s32 %s24, %s26
          %s153 = ssub.s32 256, 256
          %154 = vsyncadd %s147, %s153
          %s155 = smul.addr %s151, 2
          %s156 = smul.addr %s25, 2
          %s157 = sadd.s32 %s155, %s156
          %s158 = smul.addr %s157, 128
          %s159 = scalar_lea.hbm %s0, %s158
          %s161 = sshll.u32 %s150, 4
          %s162 = int_to_ptr.vmem [resolvable:$true] %s161
          %164 = dma.hbm_to_vmem [thread:$0]  %s159, 256, %s162, %s147
        $region20: #{tpu_custom_call.1} parent=15 // pred_fallthru
          _
        // Predicated region
        $region21: #{tpu_custom_call.1} parent=15 // pred_check
          %p165 = pneg %p90
        $region22: #{tpu_custom_call.1} parent=15 // pred_check_branch
          %167 = sbr.rel (%p165) target = $region24
        $region23: #{tpu_custom_call.1} parent=15 // pred_region
          %s168 = sand.u32 %s80, 1
          %s169 = scalar_lea.sflag [#allocation6], %s168
          %s170 = sand.u32 %s80, 1
          %s171 = smul.addr %s170, 16
          %s172 = scalar_lea.vmem [#allocation5], %s171
          %s173 = sadd.s32 %s24, %s26
          %s175 = ssub.s32 256, 256
          %176 = vsyncadd %s169, %s175
          %s177 = smul.addr %s173, 2
          %s178 = smul.addr %s25, 2
          %s179 = sadd.s32 %s177, %s178
          %s180 = smul.addr %s179, 128
          %s181 = scalar_lea.hbm %s1, %s180
          %s183 = sshll.u32 %s172, 4
          %s184 = int_to_ptr.vmem [resolvable:$true] %s183
          %186 = dma.hbm_to_vmem [thread:$0]  %s181, 256, %s184, %s169
        $region24: #{tpu_custom_call.1} parent=15 // pred_fallthru
          _
      $region16: #{tpu_custom_call.1} parent=5 // pred_fallthru
        _
      %p187 = scmp.le.s32.totalorder 1, %s17
      %p188 = scmp.lt.s32.totalorder %s17, 3
      %p189 = pnand %p187, %p188
      %p190 = pneg %p189
      // Predicated region
      $region25: #{tpu_custom_call.1} parent=5 // pred_check
        _
      $region26: #{tpu_custom_call.1} parent=5 // pred_check_branch
        %192 = sbr.rel (%p189) target = $region28
      $region27: #{tpu_custom_call.1} parent=5 // pred_region
        %s193 = ssub.s32 %s17, 1
        %s194 = sand.u32 %s53, 1
        %s195 = scalar_lea.sflag [#allocation3], %s194
        %s196 = sand.u32 %s53, 1
        %s197 = smul.addr %s196, 16
        %s198 = scalar_lea.vmem [#allocation2], %s197
        // Predicated region
        $region29: #{tpu_custom_call.1} parent=27 // pred_check
          %p199 = pneg %p66
        $region30: #{tpu_custom_call.1} parent=27 // pred_check_branch
          %201 = sbr.rel (%p199) target = $region32
        $region31: #{tpu_custom_call.1} parent=27 // pred_region
          %202 = dma.done %s195, 256
        $region32: #{tpu_custom_call.1} parent=27 // pred_fallthru
          _
        %s203 = sand.u32 %s83, 1
        %s204 = scalar_lea.sflag [#allocation6], %s203
        %s205 = sand.u32 %s83, 1
        %s206 = smul.addr %s205, 16
        %s207 = scalar_lea.vmem [#allocation5], %s206
        // Predicated region
        $region33: #{tpu_custom_call.1} parent=27 // pred_check
          %p208 = pneg %p96
        $region34: #{tpu_custom_call.1} parent=27 // pred_check_branch
          %210 = sbr.rel (%p208) target = $region36
        $region35: #{tpu_custom_call.1} parent=27 // pred_region
          %211 = dma.done %s204, 256
        $region36: #{tpu_custom_call.1} parent=27 // pred_fallthru
          _
        %s212 = sand.u32 %s53, 1
        %s213 = scalar_lea.sflag [#allocation3], %s212
        %s214 = sand.u32 %s53, 1
        %s215 = smul.addr %s214, 16
        %s216 = scalar_lea.vmem [#allocation2], %s215
        %p217 = pneg %p66
        %p218 = pneg %p63
        %s219 = sand.u32 %s83, 1
        %s220 = scalar_lea.sflag [#allocation6], %s219
        %s221 = sand.u32 %s83, 1
        %s222 = smul.addr %s221, 16
        %s223 = scalar_lea.vmem [#allocation5], %s222
        %p224 = pneg %p96
        %p225 = pneg %p93
        %p226 = pneg %p124
        %p227 = pneg %p121
        %s228 = sand.u32 %s111, 1
        %s229 = scalar_lea.sflag [#allocation4], %s228
        %s230 = sand.u32 %s111, 1
        %s231 = smul.addr %s230, 32
        %s232 = scalar_lea.vmem [#allocation7], %s231
        %s233 = sadd.s32 %s27, %s29
        %s234 = sadd.s32 %s27, %s29
        %p235 = scmp.eq.s32.totalorder %s29, 0
        // Predicated region
        $region37: #{tpu_custom_call.1} parent=27 // pred_check
          %p236 = pneg %p235
        $region38: #{tpu_custom_call.1} parent=27 // pred_check_branch
          %238 = sbr.rel (%p236) target = $region40
        $region39: #{tpu_custom_call.1} parent=27 // pred_region
          %239 = vst [vmem:[%s232] sm:$0xff] 0.0
          %240 = vst [vmem:[%s232 + $0x8] sm:$0xff] 0.0
          %241 = vst [vmem:[%s232 + $0x10] sm:$0xff] 0.0
          %242 = vst [vmem:[%s232 + $0x18] sm:$0xff] 0.0
        $region40: #{tpu_custom_call.1} parent=27 // pred_fallthru
          _
        %v243 = vld [vmem:[%s198] sm:$0xff]
        %v244 = vld [vmem:[%s198 + $0x8] sm:$0xff]
        %v245 = vld [vmem:[%s207] sm:$0xff]
        %v246 = vld [vmem:[%s207 + $0x8] sm:$0xff]
        %v247 = vmul.f32 %v243, %v245
        %v248 = vmul.f32 %v244, %v246
        %v249 = vadd.f32 %v243, %v245
        %v250 = vadd.f32 %v244, %v246
        %v251 = vadd.f32 %v247, 0.0
        %v252 = vadd.f32 %v248, 0.0
        %v253 = vadd.f32 %v249, 0.0
        %v254 = vadd.f32 %v250, 0.0
        %v255 = vadd.f32 %v251, 0.0
        %v256 = vadd.f32 %v252, 0.0
        %v257 = vadd.f32 %v253, 0.0
        %v258 = vadd.f32 %v254, 0.0
        %v259 = vld [vmem:[%s232] sm:$0xff]
        %v260 = vld [vmem:[%s232 + $0x8] sm:$0xff]
        %v261 = vadd.f32 %v259, %v255
        %v262 = vadd.f32 %v260, %v256
        %263 = vst [vmem:[%s232] sm:$0xff] %v261
        %264 = vst [vmem:[%s232 + $0x8] sm:$0xff] %v262
        %s265 = scalar_lea.vmem %s232, 16 [#allocation7]
        %v266 = vld [vmem:[%s265] sm:$0xff]
        %v267 = vld [vmem:[%s265 + $0x8] sm:$0xff]
        %v268 = vadd.f32 %v266, %v257
        %v269 = vadd.f32 %v267, %v258
        %270 = vst [vmem:[%s265] sm:$0xff] %v268
        %271 = vst [vmem:[%s265 + $0x8] sm:$0xff] %v269
        %s272 = sand.u32 %s111, 1
        %s273 = scalar_lea.sflag [#allocation4], %s272
        %s274 = sand.u32 %s111, 1
        %s275 = smul.addr %s274, 32
        %s276 = scalar_lea.vmem [#allocation7], %s275
        // Predicated region
        $region41: #{tpu_custom_call.1} parent=27 // pred_check
          %p277 = pneg %p121
        $region42: #{tpu_custom_call.1} parent=27 // pred_check_branch
          %279 = sbr.rel (%p277) target = $region44
        $region43: #{tpu_custom_call.1} parent=27 // pred_region
          %s281 = ssub.s32 512, 512
          %282 = vsyncadd %s273, %s281
          %s283 = smul.addr %s28, 4
          %s284 = smul.addr %s27, 8
          %s285 = sadd.s32 %s283, %s284
          %s286 = smul.addr %s285, 128
          %s287 = scalar_lea.hbm %s2, %s286
          %s288 = sshll.u32 %s276, 4
          %s289 = int_to_ptr.vmem [resolvable:$true] %s288
          %294 = dma.vmem_to_hbm [thread:$0]  %s289, 512, %s287, %s273, 256, 256, 16
        $region44: #{tpu_custom_call.1} parent=27 // pred_fallthru
          _
      $region28: #{tpu_custom_call.1} parent=5 // pred_fallthru
        _
      %p295 = scmp.le.s32.totalorder 2, %s17
      // Predicated region
      $region45: #{tpu_custom_call.1} parent=5 // pred_check
        %p296 = pneg %p295
      $region46: #{tpu_custom_call.1} parent=5 // pred_check_branch
        %298 = sbr.rel (%p296) target = $region48
      $region47: #{tpu_custom_call.1} parent=5 // pred_region
        %s299 = ssub.s32 %s17, 2
        // Predicated region
        $region49: #{tpu_custom_call.1} parent=47 // pred_check
          %p300 = pneg %p127
        $region50: #{tpu_custom_call.1} parent=47 // pred_check_branch
          %302 = sbr.rel (%p300) target = $region52
        $region51: #{tpu_custom_call.1} parent=47 // pred_region
          %s303 = sand.u32 %s112, 1
          %s304 = scalar_lea.sflag [#allocation4], %s303
          %s305 = sand.u32 %s112, 1
          %s306 = smul.addr %s305, 32
          %s307 = scalar_lea.vmem [#allocation7], %s306
          %308 = dma.done %s304, 512
        $region52: #{tpu_custom_call.1} parent=47 // pred_fallthru
          _
      $region48: #{tpu_custom_call.1} parent=5 // pred_fallthru
        _
    $region6: #{tpu_custom_call.1} parent=1 // loop_footer
      %s21 = sadd.s32 1, %s17
    $region7: #{tpu_custom_call.1} parent=1 // loop_footer_branch
      %16 = sbr.rel target = $region3
    $region8: #{tpu_custom_call.1} parent=1 // loop_exit
      _
    %309 = vsyncpa [#allocation3], 1
    %s310 = scalar_lea.sflag [#allocation3], 1
    %311 = vsyncpa %s310, 1
    %312 = vsyncpa [#allocation6], 1
    %s313 = scalar_lea.sflag [#allocation6], 1
    %314 = vsyncpa %s313, 1
    %315 = vsyncpa [#allocation4], 1
    %s316 = scalar_lea.sflag [#allocation4], 1
    %317 = vsyncpa %s316, 1

</llo_original>
